<compile_context>
chip_gen: v7x
topology: tpu7x:2x2x1
jax: 0.10.0
libtpu: 0.0.40
codegen_flags: <defaults>
</compile_context>

<pallas_src>
import functools

import jax
import jax.numpy as jnp
from jax.experimental import pallas as pl
from jax.experimental.pallas import tpu as pltpu

LATENT_DIM = 16
NEG_SLOPE = 0.01          # torch.nn.LeakyReLU default negative_slope
IMG_CH = 8                # RGB padded 3 -> 8 channels (padded channels use zero weights)

_PAR1 = pltpu.CompilerParams(dimension_semantics=("parallel",))
_ARB1 = pltpu.CompilerParams(dimension_semantics=("arbitrary",))


# --------------------------- in-kernel helpers --------------------------------

def _leaky(x):
    return jnp.where(x > 0, x, NEG_SLOPE * x)


def _sigmoid(x):
    # numerically stable sigmoid from ops that lower cleanly in Mosaic
    e = jnp.exp(-jnp.abs(x))
    return jnp.where(x >= 0, 1.0 / (1.0 + e), e / (1.0 + e))


def _apply_act(x, act):
    if act == "lrelu":
        return _leaky(x)
    if act == "sigmoid":
        return _sigmoid(x)
    return x


# --------------------------- kernels -------------------------------------------

def _conv3x3_kernel(x_ref, w_ref, b_ref, o_ref, *, act):
    """3x3 'same' conv on a spatially pre-padded NHWC block.
    x_ref: (1, H+2, W+2, Cin) f32   w_ref: (9, Cin, Cout) bf16   b_ref: (1, Cout) f32
    o_ref: (1, H, W, Cout) f32
    """
    _, Hp, Wp, Cin = x_ref.shape
    H, W = Hp - 2, Wp - 2
    Cout = o_ref.shape[-1]
    acc = jnp.zeros((H * W, Cout), jnp.float32)
    for dy in range(3):
        for dx in range(3):
            patch = x_ref[0, dy:dy + H, dx:dx + W, :]          # (H, W, Cin)
            acc = acc + jnp.dot(patch.reshape(H * W, Cin).astype(jnp.bfloat16),
                                w_ref[dy * 3 + dx],
                                preferred_element_type=jnp.float32)
    acc = _apply_act(acc + b_ref[...], act)
    o_ref[0] = acc.reshape(H, W, Cout)


def _convT2x2_kernel(x_ref, w_ref, b_ref, o_ref):
    """2x2 stride-2 transposed conv: one matmul producing all 4 output phases.
    x_ref: (1, H, W, Cin)   w_ref: (Cin, 4*Cout) bf16 (cols ordered (di, dj, cout))
    o_ref: (1, H*W, 4*Cout)
    """
    _, H, W, Cin = x_ref.shape
    x2 = x_ref[0].reshape(H * W, Cin).astype(jnp.bfloat16)
    o_ref[0] = (jnp.dot(x2, w_ref[...], preferred_element_type=jnp.float32)
                + b_ref[...])


def _maxpool_kernel(xe_ref, xo_ref, o_ref):
    """2x2 stride-2 max pool; even/odd column halves supplied by the wrapper.
    xe_ref/xo_ref: (1, H, W/2, C)   o_ref: (1, H/2, W/2, C)
    """
    m = jnp.maximum(xe_ref[0], xo_ref[0])                       # (H, Wo, C)
    H, Wo, C = m.shape
    o_ref[0] = jnp.max(m.reshape(H // 2, 2, Wo, C), axis=1)


def _linear_kernel(x_ref, w_ref, b_ref, o_ref):
    o_ref[...] = (jnp.dot(x_ref[...], w_ref[...],
                          preferred_element_type=jnp.float32) + b_ref[...])


# --------------------------- pallas_call wrappers ------------------------------

def _full_spec(shape):
    nd = len(shape)
    return pl.BlockSpec(tuple(shape), lambda b, _nd=nd: (0,) * _nd)


def run_conv3x3(x, w, b, act):
    B, H, W, Cin = x.shape
    Cout = w.shape[-1]
    xp = jnp.pad(x, ((0, 0), (1, 1), (1, 1), (0, 0)))           # 1-px spatial halo
    kern = functools.partial(_conv3x3_kernel, act=act)
    return pl.pallas_call(
        kern,
        out_shape=jax.ShapeDtypeStruct((B, H, W, Cout), jnp.float32),
        grid=(B,),
        in_specs=[pl.BlockSpec((1, H + 2, W + 2, Cin), lambda bb: (bb, 0, 0, 0)),
                  _full_spec(w.shape),
                  _full_spec(b.shape)],
        out_specs=pl.BlockSpec((1, H, W, Cout), lambda bb: (bb, 0, 0, 0)),
        compiler_params=_PAR1,
    )(xp, w, b)


def run_convT2x2(x, w, b):
    B, H, W, Cin = x.shape
    C4 = w.shape[-1]
    Cout = C4 // 4
    y = pl.pallas_call(
        _convT2x2_kernel,
        out_shape=jax.ShapeDtypeStruct((B, H * W, C4), jnp.float32),
        grid=(B,),
        in_specs=[pl.BlockSpec((1, H, W, Cin), lambda bb: (bb, 0, 0, 0)),
                  _full_spec(w.shape),
                  _full_spec(b.shape)],
        out_specs=pl.BlockSpec((1, H * W, C4), lambda bb: (bb, 0, 0)),
        compiler_params=_PAR1,
    )(x, w, b)
    # interleave the 4 phases (di, dj) into (2H, 2W): cheap XLA layout glue, tiny data
    y = y.reshape(B, H, W, 2, 2, Cout).transpose(0, 1, 3, 2, 4, 5)
    return y.reshape(B, 2 * H, 2 * W, Cout)


def run_maxpool2x2(x):
    B, H, W, C = x.shape
    Ho, Wo = H // 2, W // 2
    xe = x[:, :, 0::2, :]                                        # even columns (XLA slice)
    xo = x[:, :, 1::2, :]                                        # odd columns
    return pl.pallas_call(
        _maxpool_kernel,
        out_shape=jax.ShapeDtypeStruct((B, Ho, Wo, C), jnp.float32),
        grid=(B,),
        in_specs=[pl.BlockSpec((1, H, Wo, C), lambda bb: (bb, 0, 0, 0)),
                  pl.BlockSpec((1, H, Wo, C), lambda bb: (bb, 0, 0, 0))],
        out_specs=pl.BlockSpec((1, Ho, Wo, C), lambda bb: (bb, 0, 0, 0)),
        compiler_params=_PAR1,
    )(xe, xo)


def run_linear(x, w, b):
    B, F = x.shape
    O = w.shape[1]
    return pl.pallas_call(
        _linear_kernel,
        out_shape=jax.ShapeDtypeStruct((B, O), jnp.float32),
        grid=(1,),
        in_specs=[pl.BlockSpec((B, F), lambda i: (0, 0)),
                  pl.BlockSpec((F, O), lambda i: (0, 0)),
                  pl.BlockSpec((1, O), lambda i: (0, 0))],
        out_specs=pl.BlockSpec((B, O), lambda i: (0, 0)),
        compiler_params=_ARB1,
    )(x, w, b)


# --------------------------- parameters ----------------------------------------

def _conv3x3_init(key, cin, cout, cin_pad=None, cout_pad=None):
    kw, kb = jax.random.split(key)
    fan_in = float(9 * cin)
    w = jax.random.normal(kw, (3, 3, cin, cout), jnp.float32) / jnp.sqrt(fan_in)
    b = jax.random.normal(kb, (cout,), jnp.float32) * 0.01
    if cout_pad is not None and cout_pad > cout:
        w = jnp.pad(w, ((0, 0), (0, 0), (0, 0), (0, cout_pad - cout)))
        b = jnp.pad(b, ((0, cout_pad - cout),))
        cout = cout_pad
    if cin_pad is not None and cin_pad > cin:
        w = jnp.pad(w, ((0, 0), (0, 0), (0, cin_pad - cin), (0, 0)))
        cin = cin_pad
    return (w.reshape(9, cin, cout).astype(jnp.bfloat16),
            b.reshape(1, cout).astype(jnp.float32))


def _convT2x2_init(key, cin, cout):
    kw, kb = jax.random.split(key)
    fan_in = float(4 * cin)
    w = jax.random.normal(kw, (cin, 2, 2, cout), jnp.float32) / jnp.sqrt(fan_in)
    b = jax.random.normal(kb, (cout,), jnp.float32) * 0.01
    wmat = w.reshape(cin, 4 * cout).astype(jnp.bfloat16)        # cols ordered (di, dj, cout)
    bmat = jnp.tile(b, (4,)).reshape(1, 4 * cout).astype(jnp.float32)
    return wmat, bmat


def init_params(key, multiplier=1):
    m = multiplier
    cm = 2                                                      # critic_multiplier
    keys = iter(jax.random.split(key, 64))

    gen_defs = [
        ("c", 32 * m, 32 * m, "lrelu"),
        ("c", 32 * m, 32 * m, "lrelu"),
        ("t", 32 * m, 64 * m, None),                            # 8 -> 16
        ("c", 64 * m, 64 * m, "lrelu"),
        ("c", 64 * m, 64 * m, "lrelu"),
        ("c", 64 * m, 64 * m, "lrelu"),
        ("c", 64 * m, 64 * m, "lrelu"),
        ("t", 64 * m, 64 * m, None),                            # 16 -> 32
        ("c", 64 * m, 64 * m, "lrelu"),
        ("c", 64 * m, 32 * m, "lrelu"),
        ("t", 32 * m, 32 * m, None),                            # 32 -> 64
        ("c", 32 * m, 16 * m, "lrelu"),
        ("c", 16 * m, 16 * m, "lrelu"),
        ("c", 16 * m, 3, "sigmoid"),                            # Cout padded 3 -> IMG_CH
    ]
    gen_layers, gen_wb = [], []
    for kind, cin, cout, act in gen_defs:
        if kind == "c":
            cout_pad = IMG_CH if cout == 3 else None
            wb = _conv3x3_init(next(keys), cin, cout, cout_pad=cout_pad)
        else:
            wb = _convT2x2_init(next(keys), cin, cout)
        gen_layers.append((kind, act))
        gen_wb.append(wb)

    disc_defs = [
        ("c", 3, 24 * cm, "lrelu"),                             # Cin padded 3 -> IMG_CH
        ("c", 24 * cm, 24 * cm, "lrelu"),
        ("p", 0, 0, None),                                      # 64 -> 32
        ("c", 24 * cm, 48 * cm, "lrelu"),
        ("p", 0, 0, None),                                      # 32 -> 16
        ("c", 48 * cm, 48 * cm, "lrelu"),
        ("p", 0, 0, None),                                      # 16 -> 8
        ("c", 48 * cm, 24 * cm, "lrelu"),
        ("c", 24 * cm, 24 * cm, None),                          # no activation before Flatten
    ]
    disc_layers, disc_wb = [], []
    for kind, cin, cout, act in disc_defs:
        if kind == "p":
            disc_layers.append(("p", None))
            disc_wb.append(None)
            continue
        cin_pad = IMG_CH if cin == 3 else None
        wb = _conv3x3_init(next(keys), cin, cout, cin_pad=cin_pad)
        disc_layers.append(("c", act))
        disc_wb.append(wb)

    # latent_to_linear: Linear(LATENT_DIM, 32m*8*8); columns/bias permuted so the kernel
    # output is already NHWC-flat (torch's view(B,32m,8,8) is NCHW-flat) -> free reshape.
    kw, kb = jax.random.split(next(keys))
    lat_out = 32 * m * 8 * 8
    lat_w = jax.random.normal(kw, (LATENT_DIM, lat_out), jnp.float32) / jnp.sqrt(float(LATENT_DIM))
    lat_b = jax.random.normal(kb, (lat_out,), jnp.float32) * 0.01
    lat_w = lat_w.reshape(LATENT_DIM, 32 * m, 8, 8).transpose(0, 2, 3, 1).reshape(LATENT_DIM, lat_out)
    lat_b = lat_b.reshape(32 * m, 8, 8).transpose(1, 2, 0).reshape(1, lat_out)

    # critic FC: Linear(24*cm*8*8, 1); rows permuted from NCHW-flatten order to NHWC (h,w,c).
    fc_in = 24 * cm * 8 * 8
    fc_w = jax.random.normal(next(keys), (fc_in,), jnp.float32) / jnp.sqrt(float(fc_in))
    fc_w = fc_w.reshape(24 * cm, 8, 8).transpose(1, 2, 0).reshape(fc_in, 1)
    fc_b = jnp.zeros((1, 1), jnp.float32)

    return dict(multiplier=m, cm=cm,
                gen_layers=tuple(gen_layers), gen_wb=gen_wb,
                disc_layers=tuple(disc_layers), disc_wb=disc_wb,
                lat_w=lat_w, lat_b=lat_b, fc_w=fc_w, fc_b=fc_b)


# --------------------------- forward --------------------------------------------

def forward(params, z):
    """z: (B, LATENT_DIM) -> (generated image NHWC (B,64,64,3), critic score (B,1))."""
    B = z.shape[0]
    m = params["multiplier"]
    cm = params["cm"]

    h = run_linear(z, params["lat_w"], params["lat_b"])          # (B, 32m*8*8) NHWC-flat
    x = h.reshape(B, 8, 8, 32 * m)                               # free (cols pre-permuted)

    for (kind, act), wb in zip(params["gen_layers"], params["gen_wb"]):
        if kind == "c":
            x = run_conv3x3(x, wb[0], wb[1], act)
        else:
            x = run_convT2x2(x, wb[0], wb[1])
    img_pad = x                                                  # (B, 64, 64, IMG_CH)

    y = img_pad
    for (kind, act), wb in zip(params["disc_layers"], params["disc_wb"]):
        if kind == "p":
            y = run_maxpool2x2(y)
        else:
            y = run_conv3x3(y, wb[0], wb[1], act)
    feat = y.reshape(B, 8 * 8 * 24 * cm)                         # NHWC-flat, matches fc_w rows
    score = run_linear(feat, params["fc_w"], params["fc_b"])     # (B, 1)

    img = img_pad[..., :3]                                       # drop zero-weight channels
    return img, score


if __name__ == "__main__":
    key = jax.random.PRNGKey(0)
    pkey, zkey = jax.random.split(key)
    params = init_params(pkey, multiplier=1)
    z = jax.random.normal(zkey, (2, LATENT_DIM), jnp.float32)

    img, score = forward(params, z)
    img, score = jax.block_until_ready((img, score))

    assert img.shape == (2, 64, 64, 3)        # NHWC view of torch's (2, 3, 64, 64)
    assert score.shape == (2, 1)
    assert bool(jnp.all(jnp.isfinite(img))) and bool(jnp.all(jnp.isfinite(score)))
    assert bool(jnp.all((img >= 0.0) & (img <= 1.0)))            # sigmoid range
    print("KERNEL_OK")
</pallas_src>

<mosaic_0001>
module attributes {stable_mosaic.version = 11 : i64} {
  func.func @_linear_kernel(%arg0: i32, %arg1: memref<2x16xf32, #tpu.memory_space<vmem>>, %arg2: memref<16x2048xf32, #tpu.memory_space<vmem>>, %arg3: memref<1x2048xf32, #tpu.memory_space<vmem>>, %arg4: memref<2x2048xf32, #tpu.memory_space<vmem>>) attributes {dimension_semantics = [#tpu.dimension_semantics<arbitrary>], iteration_bounds = array<i64: 1>, scalar_prefetch = 0 : i64, scratch_operands = 0 : i64, tpu.core_type = #tpu.core_type<tc>, window_params = [{pipeline_mode = #tpu.pipeline_mode<synchronous>, transform_indices = @transform_0, window_bounds = array<i64: 2, 16>}, {pipeline_mode = #tpu.pipeline_mode<synchronous>, transform_indices = @transform_1, window_bounds = array<i64: 16, 2048>}, {pipeline_mode = #tpu.pipeline_mode<synchronous>, transform_indices = @transform_2, window_bounds = array<i64: 1, 2048>}, {pipeline_mode = #tpu.pipeline_mode<synchronous>, transform_indices = @transform_3, window_bounds = array<i64: 2, 2048>}]} {
    %c0 = arith.constant 0 : index
    %c0_0 = arith.constant 0 : index
    %0 = vector.load %arg1[%c0, %c0_0] : memref<2x16xf32, #tpu.memory_space<vmem>>, vector<2x16xf32>
    %c0_1 = arith.constant 0 : index
    %c0_2 = arith.constant 0 : index
    %1 = vector.load %arg2[%c0_1, %c0_2] : memref<16x2048xf32, #tpu.memory_space<vmem>>, vector<16x2048xf32>
    %cst = arith.constant dense<0.000000e+00> : vector<2x2048xf32>
    %2 = tpu.matmul %0, %1, %cst {dimension_numbers = #tpu.dot_dimension_numbers<[1], [0], [0], [1], [0, 0, 1, 1], [], []>} : vector<2x16xf32>, vector<16x2048xf32>, vector<2x2048xf32> -> vector<2x2048xf32>
    %c0_3 = arith.constant 0 : index
    %c0_4 = arith.constant 0 : index
    %3 = vector.load %arg3[%c0_3, %c0_4] : memref<1x2048xf32, #tpu.memory_space<vmem>>, vector<1x2048xf32>
    %4 = vector.broadcast %3 : vector<1x2048xf32> to vector<2x2048xf32>
    %5 = arith.addf %2, %4 : vector<2x2048xf32>
    %c0_5 = arith.constant 0 : index
    %c0_6 = arith.constant 0 : index
    %6 = vector.load %arg4[%c0_5, %c0_6] : memref<2x2048xf32, #tpu.memory_space<vmem>>, vector<2x2048xf32>
    tpu.vector_store %arg4[%c0_5, %c0_6], %5 {strides = array<i32>} : memref<2x2048xf32, #tpu.memory_space<vmem>>, vector<2x2048xf32>,
    return
  }
  func.func @transform_0(%arg0: i32) -> (i32, i32) {
    %c0_i32 = arith.constant 0 : i32
    %c0_i32_0 = arith.constant 0 : i32
    %c0_i32_1 = arith.constant 0 : i32
    return %c0_i32, %c0_i32_0 : i32, i32
  }
  func.func @transform_1(%arg0: i32) -> (i32, i32) {
    %c0_i32 = arith.constant 0 : i32
    %c0_i32_0 = arith.constant 0 : i32
    %c0_i32_1 = arith.constant 0 : i32
    return %c0_i32, %c0_i32_0 : i32, i32
  }
  func.func @transform_2(%arg0: i32) -> (i32, i32) {
    %c0_i32 = arith.constant 0 : i32
    %c0_i32_0 = arith.constant 0 : i32
    %c0_i32_1 = arith.constant 0 : i32
    return %c0_i32, %c0_i32_0 : i32, i32
  }
  func.func @transform_3(%arg0: i32) -> (i32, i32) {
    %c0_i32 = arith.constant 0 : i32
    %c0_i32_0 = arith.constant 0 : i32
    %c0_i32_1 = arith.constant 0 : i32
    return %c0_i32, %c0_i32_0 : i32, i32
  }
}

</mosaic_0001>

<llo_original>
// kernel: tpu_custom_call.1
$region0: #{tpu_custom_call.1}
  #allocation0 [shape = 'u32[]', space=smem, size = 0x4, offset = 0x4, fixed_abs, tag = 'smem constant byte address 0x4 - core index']
  #allocation1 [shape = 'u32[144,128]{1,0:T(1,128)}', space=vmem, size = 0x12000, scoped, tag = 'internal scratch']
  %s0 = inlined_call_operand.hbm [shape: f32[2,16], index: 0, kind: input, shape index: {}]
  %s1 = inlined_call_operand.hbm [shape: f32[16,2048], index: 1, kind: input, shape index: {}]
  %s2 = inlined_call_operand.hbm [shape: f32[1,2048], index: 2, kind: input, shape index: {}]
  %s3 = inlined_call_operand.hbm [shape: f32[2,2048], index: 3, kind: output, shape index: {}]
  %s4 = sld [smem:[#allocation0]]
  $region34: #{tpu_custom_call.1} parent=0
    _
  %s6 = ssub.s32 1, %s4
  %s7 = scalar_select 0, %s6, %s4
  $region1: #{tpu_custom_call.1} parent=0
    #allocation2 [shape = 'u8[1024]{0}', space=vmem, size = 0x400, scoped, tag = 'input window, operand 0, single buffered']
    #allocation3 [shape = 's32[1]{0}', space=sflag, size = 0x4, scoped, tag = 'scoped memory for tpu_custom_call.1']
    #allocation4 [shape = 's32[1]{0}', space=sflag, size = 0x4, scoped, tag = 'scoped memory for tpu_custom_call.1']
    #allocation5 [shape = 'u8[131072]{0}', space=vmem, size = 0x20000, scoped, tag = 'input window, operand 1, single buffered']
    #allocation6 [shape = 's32[1]{0}', space=sflag, size = 0x4, scoped, tag = 'scoped memory for tpu_custom_call.1']
    #allocation7 [shape = 'u8[8192]{0}', space=vmem, size = 0x2000, scoped, tag = 'input window, operand 2, single buffered']
    #allocation8 [shape = 'u8[16384]{0}', space=vmem, size = 0x4000, scoped, tag = 'output window, operand 0, single buffered']
    %8 = vsyncpa [#allocation3], 0
    %9 = vsyncpa [#allocation6], 0
    %10 = vsyncpa [#allocation4], 0
    // Predicated region
    $region2: #{tpu_custom_call.1} parent=1 // pred_check
      _
    $region3: #{tpu_custom_call.1} parent=1 // pred_check_branch
      %12 = sbr.rel (0) target = $region5
    $region4: #{tpu_custom_call.1} parent=1 // pred_region
      %s14 = ssub.s32 32, 32
      %15 = vsyncadd [#allocation3], %s14
      %s17 = sshll.u32 [#allocation2], 4
      %s18 = int_to_ptr.vmem [resolvable:$true] %s17
      %20 = dma.hbm_to_vmem [thread:$0]  %s0, 32, %s18, [#allocation3]
    $region5: #{tpu_custom_call.1} parent=1 // pred_fallthru
      _
    // Predicated region
    $region6: #{tpu_custom_call.1} parent=1 // pred_check
      _
    $region7: #{tpu_custom_call.1} parent=1 // pred_check_branch
      %22 = sbr.rel (0) target = $region9
    $region8: #{tpu_custom_call.1} parent=1 // pred_region
      %s24 = ssub.s32 4096, 4096
      %25 = vsyncadd [#allocation6], %s24
      %s26 = sshll.u32 [#allocation5], 4
      %s27 = int_to_ptr.vmem [resolvable:$true] %s26
      %32 = dma.hbm_to_vmem [thread:$0]  %s1, 4096, %s27, [#allocation6], 2048, 2048, 128
    $region9: #{tpu_custom_call.1} parent=1 // pred_fallthru
      _
    // Predicated region
    $region10: #{tpu_custom_call.1} parent=1 // pred_check
      _
    $region11: #{tpu_custom_call.1} parent=1 // pred_check_branch
      %34 = sbr.rel (0) target = $region13
    $region12: #{tpu_custom_call.1} parent=1 // pred_region
      %s36 = ssub.s32 256, 256
      %37 = vsyncadd [#allocation6], %s36
      %s39 = sshll.u32 [#allocation7], 4
      %s40 = int_to_ptr.vmem [resolvable:$true] %s39
      %42 = dma.hbm_to_vmem [thread:$0]  %s2, 256, %s40, [#allocation6]
    $region13: #{tpu_custom_call.1} parent=1 // pred_fallthru
      _
    // Predicated region
    $region14: #{tpu_custom_call.1} parent=1 // pred_check
      _
    $region15: #{tpu_custom_call.1} parent=1 // pred_check_branch
      %44 = sbr.rel (0) target = $region17
    $region16: #{tpu_custom_call.1} parent=1 // pred_region
      %45 = dma.done [#allocation3], 32
    $region17: #{tpu_custom_call.1} parent=1 // pred_fallthru
      _
    // Predicated region
    $region18: #{tpu_custom_call.1} parent=1 // pred_check
      _
    $region19: #{tpu_custom_call.1} parent=1 // pred_check_branch
      %47 = sbr.rel (0) target = $region21
    $region20: #{tpu_custom_call.1} parent=1 // pred_region
      %48 = dma.done [#allocation6], 4096
    $region21: #{tpu_custom_call.1} parent=1 // pred_fallthru
      _
    // Predicated region
    $region22: #{tpu_custom_call.1} parent=1 // pred_check
      _
    $region23: #{tpu_custom_call.1} parent=1 // pred_check_branch
      %50 = sbr.rel (0) target = $region25
    $region24: #{tpu_custom_call.1} parent=1 // pred_region
      %51 = dma.done [#allocation6], 256
    $region25: #{tpu_custom_call.1} parent=1 // pred_fallthru
      _
    %v52 = vld [vmem:[#allocation2] sm:$0x3]
    %v53 = vld [vmem:[#allocation5] sm:$0xff]
    %v54 = vld [vmem:[#allocation5 + $0x8] sm:$0xff]
    %v55 = vld [vmem:[#allocation5 + $0x10] sm:$0xff]
    %v56 = vld [vmem:[#allocation5 + $0x18] sm:$0xff]
    %v57 = vld [vmem:[#allocation5 + $0x20] sm:$0xff]
    %v58 = vld [vmem:[#allocation5 + $0x28] sm:$0xff]
    %v59 = vld [vmem:[#allocation5 + $0x30] sm:$0xff]
    %v60 = vld [vmem:[#allocation5 + $0x38] sm:$0xff]
    %v61 = vld [vmem:[#allocation5 + $0x40] sm:$0xff]
    %v62 = vld [vmem:[#allocation5 + $0x48] sm:$0xff]
    %v63 = vld [vmem:[#allocation5 + $0x50] sm:$0xff]
    %v64 = vld [vmem:[#allocation5 + $0x58] sm:$0xff]
    %v65 = vld [vmem:[#allocation5 + $0x60] sm:$0xff]
    %v66 = vld [vmem:[#allocation5 + $0x68] sm:$0xff]
    %v67 = vld [vmem:[#allocation5 + $0x70] sm:$0xff]
    %v68 = vld [vmem:[#allocation5 + $0x78] sm:$0xff]
    %v69 = vld [vmem:[#allocation5 + $0x80] sm:$0xff]
    %v70 = vld [vmem:[#allocation5 + $0x88] sm:$0xff]
    %v71 = vld [vmem:[#allocation5 + $0x90] sm:$0xff]
    %v72 = vld [vmem:[#allocation5 + $0x98] sm:$0xff]
    %v73 = vld [vmem:[#allocation5 + $0xa0] sm:$0xff]
    %v74 = vld [vmem:[#allocation5 + $0xa8] sm:$0xff]
    %v75 = vld [vmem:[#allocation5 + $0xb0] sm:$0xff]
    %v76 = vld [vmem:[#allocation5 + $0xb8] sm:$0xff]
    %v77 = vld [vmem:[#allocation5 + $0xc0] sm:$0xff]
    %v78 = vld [vmem:[#allocation5 + $0xc8] sm:$0xff]
    %v79 = vld [vmem:[#allocation5 + $0xd0] sm:$0xff]
    %v80 = vld [vmem:[#allocation5 + $0xd8] sm:$0xff]
    %v81 = vld [vmem:[#allocation5 + $0xe0] sm:$0xff]
    %v82 = vld [vmem:[#allocation5 + $0xe8] sm:$0xff]
    %v83 = vld [vmem:[#allocation5 + $0xf0] sm:$0xff]
    %v84 = vld [vmem:[#allocation5 + $0xf8] sm:$0xff]
    %v85 = vld [vmem:[#allocation7] sm:$0xff]
    %v86 = vld [vmem:[#allocation7 + $0x8] sm:$0xff]
    %v89 = vlaneseq
    %v90 = vshrl.u32 %v89, 7
    %v91 = vsub.s32 0, %v90
    %v92 = vrot.slane %v85, %v91
    %v93 = vlaneseq
    %v94 = vshrl.u32 %v93, 7
    %v95 = vsub.s32 1, %v94
    %v96 = vrot.slane %v85, %v95
    %v97 = vlaneseq
    %v98 = vshrl.u32 %v97, 7
    %v99 = vsub.s32 2, %v98
    %v100 = vrot.slane %v85, %v99
    %v101 = vlaneseq
    %v102 = vshrl.u32 %v101, 7
    %v103 = vsub.s32 3, %v102
    %v104 = vrot.slane %v85, %v103
    %v105 = vlaneseq
    %v106 = vshrl.u32 %v105, 7
    %v107 = vsub.s32 4, %v106
    %v108 = vrot.slane %v85, %v107
    %v109 = vlaneseq
    %v110 = vshrl.u32 %v109, 7
    %v111 = vsub.s32 5, %v110
    %v112 = vrot.slane %v85, %v111
    %v113 = vlaneseq
    %v114 = vshrl.u32 %v113, 7
    %v115 = vsub.s32 6, %v114
    %v116 = vrot.slane %v85, %v115
    %v117 = vlaneseq
    %v118 = vshrl.u32 %v117, 7
    %v119 = vsub.s32 7, %v118
    %v120 = vrot.slane %v85, %v119
    %v121 = vlaneseq
    %v122 = vshrl.u32 %v121, 7
    %v123 = vsub.s32 0, %v122
    %v124 = vrot.slane %v86, %v123
    %v125 = vlaneseq
    %v126 = vshrl.u32 %v125, 7
    %v127 = vsub.s32 1, %v126
    %v128 = vrot.slane %v86, %v127
    %v129 = vlaneseq
    %v130 = vshrl.u32 %v129, 7
    %v131 = vsub.s32 2, %v130
    %v132 = vrot.slane %v86, %v131
    %v133 = vlaneseq
    %v134 = vshrl.u32 %v133, 7
    %v135 = vsub.s32 3, %v134
    %v136 = vrot.slane %v86, %v135
    %v137 = vlaneseq
    %v138 = vshrl.u32 %v137, 7
    %v139 = vsub.s32 4, %v138
    %v140 = vrot.slane %v86, %v139
    %v141 = vlaneseq
    %v142 = vshrl.u32 %v141, 7
    %v143 = vsub.s32 5, %v142
    %v144 = vrot.slane %v86, %v143
    %v145 = vlaneseq
    %v146 = vshrl.u32 %v145, 7
    %v147 = vsub.s32 6, %v146
    %v148 = vrot.slane %v86, %v147
    %v149 = vlaneseq
    %v150 = vshrl.u32 %v149, 7
    %v151 = vsub.s32 7, %v150
    %v152 = vrot.slane %v86, %v151
    %vm169 = vcmask 130048
    %v171 = vsel %vm169, %v52, 0
    %173 = vmatprep.subr.mxu0 %v54
    %174 = vmatpush1.msra.mxu0 %v53
    %175 = vmatprep.subr.mxu0 %v70
    %176 = vmatpush1.msra.mxu0 %v69
    %177 = vmatprep.subr.mxu0 0.0
    %178 = vmatpush1.msra.mxu0 0.0
    %179 = vmatprep.subr.mxu0 0.0
    %180 = vmatpush1.msra.mxu0 0.0
    %181 = vmatprep.subr.mxu0 0.0
    %182 = vmatpush1.msra.mxu0 0.0
    %183 = vmatprep.subr.mxu0 0.0
    %184 = vmatpush1.msra.mxu0 0.0
    %185 = vmatprep.subr.mxu0 0.0
    %186 = vmatpush1.msra.mxu0 0.0
    %187 = vmatprep.subr.mxu0 0.0
    %188 = vmatpush1.msra.mxu0 0.0
    %189 = vmatprep.subr.mxu0 0.0
    %190 = vmatpush1.msra.mxu0 0.0
    %191 = vmatprep.subr.mxu0 0.0
    %192 = vmatpush1.msra.mxu0 0.0
    %193 = vmatprep.subr.mxu0 0.0
    %194 = vmatpush1.msra.mxu0 0.0
    %195 = vmatprep.subr.mxu0 0.0
    %196 = vmatpush1.msra.mxu0 0.0
    %197 = vmatprep.subr.mxu0 0.0
    %198 = vmatpush1.msra.mxu0 0.0
    %199 = vmatprep.subr.mxu0 0.0
    %200 = vmatpush1.msra.mxu0 0.0
    %201 = vmatprep.subr.mxu0 0.0
    %202 = vmatpush1.msra.mxu0 0.0
    %203 = vmatprep.subr.mxu0 0.0
    %204 = vmatpush1.msra.mxu0 0.0
    %205 = vmatprep.subr.mxu0 0.0
    %206 = vmatpush1.msra.mxu0 0.0
    %207 = vmatprep.subr.mxu0 0.0
    %208 = vmatpush1.msra.mxu0 0.0
    %209 = vmatprep.subr.mxu0 0.0
    %210 = vmatpush1.msra.mxu0 0.0
    %211 = vmatprep.subr.mxu0 0.0
    %212 = vmatpush1.msra.mxu0 0.0
    %213 = vmatprep.subr.mxu0 0.0
    %214 = vmatpush1.msra.mxu0 0.0
    %215 = vmatprep.subr.mxu0 0.0
    %216 = vmatpush1.msra.mxu0 0.0
    %217 = vmatprep.subr.mxu0 0.0
    %218 = vmatpush1.msra.mxu0 0.0
    %219 = vmatprep.subr.mxu0 0.0
    %220 = vmatpush1.msra.mxu0 0.0
    %221 = vmatprep.subr.mxu0 0.0
    %222 = vmatpush1.msra.mxu0 0.0
    %223 = vmatprep.subr.mxu0 0.0
    %224 = vmatpush1.msra.mxu0 0.0
    %225 = vmatprep.subr.mxu0 0.0
    %226 = vmatpush1.msra.mxu0 0.0
    %227 = vmatprep.subr.mxu0 0.0
    %228 = vmatpush1.msra.mxu0 0.0
    %229 = vmatprep.subr.mxu0 0.0
    %230 = vmatpush1.msra.mxu0 0.0
    %231 = vmatprep.subr.mxu0 0.0
    %232 = vmatpush1.msra.mxu0 0.0
    %233 = vmatprep.subr.mxu0 0.0
    %234 = vmatpush1.msra.mxu0 0.0
    %235 = vmatprep.subr.mxu0 0.0
    %236 = vmatpush1.msra.mxu0 0.0
    %237 = vmatprep.mubr.f32.mxu0 0.0
    %238 = vmatmul.mubr.f32.gmra.mrb[0].mxu0 %v171
    %v239 = vpop.f32.mrb[0].mxu0
    %v240 = vadd.f32 %v92, %v239
    %v241 = vpop.f32.mrb[0].mxu0
    %v242 = vadd.f32 %v96, %v241
    %243 = vdwg.mxu0
    %244 = vmatprep.subr.mxu0 %v56
    %245 = vmatpush1.msra.mxu0 %v55
    %246 = vmatprep.subr.mxu0 %v72
    %247 = vmatpush1.msra.mxu0 %v71
    %248 = vmatprep.subr.mxu0 0.0
    %249 = vmatpush1.msra.mxu0 0.0
    %250 = vmatprep.subr.mxu0 0.0
    %251 = vmatpush1.msra.mxu0 0.0
    %252 = vmatprep.subr.mxu0 0.0
    %253 = vmatpush1.msra.mxu0 0.0
    %254 = vmatprep.subr.mxu0 0.0
    %255 = vmatpush1.msra.mxu0 0.0
    %256 = vmatprep.subr.mxu0 0.0
    %257 = vmatpush1.msra.mxu0 0.0
    %258 = vmatprep.subr.mxu0 0.0
    %259 = vmatpush1.msra.mxu0 0.0
    %260 = vmatprep.subr.mxu0 0.0
    %261 = vmatpush1.msra.mxu0 0.0
    %262 = vmatprep.subr.mxu0 0.0
    %263 = vmatpush1.msra.mxu0 0.0
    %264 = vmatprep.subr.mxu0 0.0
    %265 = vmatpush1.msra.mxu0 0.0
    %266 = vmatprep.subr.mxu0 0.0
    %267 = vmatpush1.msra.mxu0 0.0
    %268 = vmatprep.subr.mxu0 0.0
    %269 = vmatpush1.msra.mxu0 0.0
    %270 = vmatprep.subr.mxu0 0.0
    %271 = vmatpush1.msra.mxu0 0.0
    %272 = vmatprep.subr.mxu0 0.0
    %273 = vmatpush1.msra.mxu0 0.0
    %274 = vmatprep.subr.mxu0 0.0
    %275 = vmatpush1.msra.mxu0 0.0
    %276 = vmatprep.subr.mxu0 0.0
    %277 = vmatpush1.msra.mxu0 0.0
    %278 = vmatprep.subr.mxu0 0.0
    %279 = vmatpush1.msra.mxu0 0.0
    %280 = vmatprep.subr.mxu0 0.0
    %281 = vmatpush1.msra.mxu0 0.0
    %282 = vmatprep.subr.mxu0 0.0
    %283 = vmatpush1.msra.mxu0 0.0
    %284 = vmatprep.subr.mxu0 0.0
    %285 = vmatpush1.msra.mxu0 0.0
    %286 = vmatprep.subr.mxu0 0.0
    %287 = vmatpush1.msra.mxu0 0.0
    %288 = vmatprep.subr.mxu0 0.0
    %289 = vmatpush1.msra.mxu0 0.0
    %290 = vmatprep.subr.mxu0 0.0
    %291 = vmatpush1.msra.mxu0 0.0
    %292 = vmatprep.subr.mxu0 0.0
    %293 = vmatpush1.msra.mxu0 0.0
    %294 = vmatprep.subr.mxu0 0.0
    %295 = vmatpush1.msra.mxu0 0.0
    %296 = vmatprep.subr.mxu0 0.0
    %297 = vmatpush1.msra.mxu0 0.0
    %298 = vmatprep.subr.mxu0 0.0
    %299 = vmatpush1.msra.mxu0 0.0
    %300 = vmatprep.subr.mxu0 0.0
    %301 = vmatpush1.msra.mxu0 0.0
    %302 = vmatprep.subr.mxu0 0.0
    %303 = vmatpush1.msra.mxu0 0.0
    %304 = vmatprep.subr.mxu0 0.0
    %305 = vmatpush1.msra.mxu0 0.0
    %306 = vmatprep.subr.mxu0 0.0
    %307 = vmatpush1.msra.mxu0 0.0
    %308 = vmatprep.mubr.f32.mxu0 0.0
    %309 = vmatmul.mubr.f32.gmra.mrb[0].mxu0 %v171
    %v310 = vpop.f32.mrb[0].mxu0
    %v311 = vadd.f32 %v100, %v310
    %v312 = vpop.f32.mrb[0].mxu0
    %v313 = vadd.f32 %v104, %v312
    %314 = vdwg.mxu0
    %315 = vmatprep.subr.mxu0 %v58
    %316 = vmatpush1.msra.mxu0 %v57
    %317 = vmatprep.subr.mxu0 %v74
    %318 = vmatpush1.msra.mxu0 %v73
    %319 = vmatprep.subr.mxu0 0.0
    %320 = vmatpush1.msra.mxu0 0.0
    %321 = vmatprep.subr.mxu0 0.0
    %322 = vmatpush1.msra.mxu0 0.0
    %323 = vmatprep.subr.mxu0 0.0
    %324 = vmatpush1.msra.mxu0 0.0
    %325 = vmatprep.subr.mxu0 0.0
    %326 = vmatpush1.msra.mxu0 0.0
    %327 = vmatprep.subr.mxu0 0.0
    %328 = vmatpush1.msra.mxu0 0.0
    %329 = vmatprep.subr.mxu0 0.0
    %330 = vmatpush1.msra.mxu0 0.0
    %331 = vmatprep.subr.mxu0 0.0
    %332 = vmatpush1.msra.mxu0 0.0
    %333 = vmatprep.subr.mxu0 0.0
    %334 = vmatpush1.msra.mxu0 0.0
    %335 = vmatprep.subr.mxu0 0.0
    %336 = vmatpush1.msra.mxu0 0.0
    %337 = vmatprep.subr.mxu0 0.0
    %338 = vmatpush1.msra.mxu0 0.0
    %339 = vmatprep.subr.mxu0 0.0
    %340 = vmatpush1.msra.mxu0 0.0
    %341 = vmatprep.subr.mxu0 0.0
    %342 = vmatpush1.msra.mxu0 0.0
    %343 = vmatprep.subr.mxu0 0.0
    %344 = vmatpush1.msra.mxu0 0.0
    %345 = vmatprep.subr.mxu0 0.0
    %346 = vmatpush1.msra.mxu0 0.0
    %347 = vmatprep.subr.mxu0 0.0
    %348 = vmatpush1.msra.mxu0 0.0
    %349 = vmatprep.subr.mxu0 0.0
    %350 = vmatpush1.msra.mxu0 0.0
    %351 = vmatprep.subr.mxu0 0.0
    %352 = vmatpush1.msra.mxu0 0.0
    %353 = vmatprep.subr.mxu0 0.0
    %354 = vmatpush1.msra.mxu0 0.0
    %355 = vmatprep.subr.mxu0 0.0
    %356 = vmatpush1.msra.mxu0 0.0
    %357 = vmatprep.subr.mxu0 0.0
    %358 = vmatpush1.msra.mxu0 0.0
    %359 = vmatprep.subr.mxu0 0.0
    %360 = vmatpush1.msra.mxu0 0.0
    %361 = vmatprep.subr.mxu0 0.0
    %362 = vmatpush1.msra.mxu0 0.0
    %363 = vmatprep.subr.mxu0 0.0
    %364 = vmatpush1.msra.mxu0 0.0
    %365 = vmatprep.subr.mxu0 0.0
    %366 = vmatpush1.msra.mxu0 0.0
    %367 = vmatprep.subr.mxu0 0.0
    %368 = vmatpush1.msra.mxu0 0.0
    %369 = vmatprep.subr.mxu0 0.0
    %370 = vmatpush1.msra.mxu0 0.0
    %371 = vmatprep.subr.mxu0 0.0
    %372 = vmatpush1.msra.mxu0 0.0
    %373 = vmatprep.subr.mxu0 0.0
    %374 = vmatpush1.msra.mxu0 0.0
    %375 = vmatprep.subr.mxu0 0.0
    %376 = vmatpush1.msra.mxu0 0.0
    %377 = vmatprep.subr.mxu0 0.0
    %378 = vmatpush1.msra.mxu0 0.0
    %379 = vmatprep.mubr.f32.mxu0 0.0
    %380 = vmatmul.mubr.f32.gmra.mrb[0].mxu0 %v171
    %v381 = vpop.f32.mrb[0].mxu0
    %v382 = vadd.f32 %v108, %v381
    %v383 = vpop.f32.mrb[0].mxu0
    %v384 = vadd.f32 %v112, %v383
    %385 = vdwg.mxu0
    %386 = vmatprep.subr.mxu0 %v60
    %387 = vmatpush1.msra.mxu0 %v59
    %388 = vmatprep.subr.mxu0 %v76
    %389 = vmatpush1.msra.mxu0 %v75
    %390 = vmatprep.subr.mxu0 0.0
    %391 = vmatpush1.msra.mxu0 0.0
    %392 = vmatprep.subr.mxu0 0.0
    %393 = vmatpush1.msra.mxu0 0.0
    %394 = vmatprep.subr.mxu0 0.0
    %395 = vmatpush1.msra.mxu0 0.0
    %396 = vmatprep.subr.mxu0 0.0
    %397 = vmatpush1.msra.mxu0 0.0
    %398 = vmatprep.subr.mxu0 0.0
    %399 = vmatpush1.msra.mxu0 0.0
    %400 = vmatprep.subr.mxu0 0.0
    %401 = vmatpush1.msra.mxu0 0.0
    %402 = vmatprep.subr.mxu0 0.0
    %403 = vmatpush1.msra.mxu0 0.0
    %404 = vmatprep.subr.mxu0 0.0
    %405 = vmatpush1.msra.mxu0 0.0
    %406 = vmatprep.subr.mxu0 0.0
    %407 = vmatpush1.msra.mxu0 0.0
    %408 = vmatprep.subr.mxu0 0.0
    %409 = vmatpush1.msra.mxu0 0.0
    %410 = vmatprep.subr.mxu0 0.0
    %411 = vmatpush1.msra.mxu0 0.0
    %412 = vmatprep.subr.mxu0 0.0
    %413 = vmatpush1.msra.mxu0 0.0
    %414 = vmatprep.subr.mxu0 0.0
    %415 = vmatpush1.msra.mxu0 0.0
    %416 = vmatprep.subr.mxu0 0.0
    %417 = vmatpush1.msra.mxu0 0.0
    %418 = vmatprep.subr.mxu0 0.0
    %419 = vmatpush1.msra.mxu0 0.0
    %420 = vmatprep.subr.mxu0 0.0
    %421 = vmatpush1.msra.mxu0 0.0
    %422 = vmatprep.subr.mxu0 0.0
    %423 = vmatpush1.msra.mxu0 0.0
    %424 = vmatprep.subr.mxu0 0.0
    %425 = vmatpush1.msra.mxu0 0.0
    %426 = vmatprep.subr.mxu0 0.0
    %427 = vmatpush1.msra.mxu0 0.0
    %428 = vmatprep.subr.mxu0 0.0
    %429 = vmatpush1.msra.mxu0 0.0
    %430 = vmatprep.subr.mxu0 0.0
    %431 = vmatpush1.msra.mxu0 0.0
    %432 = vmatprep.subr.mxu0 0.0
    %433 = vmatpush1.msra.mxu0 0.0
    %434 = vmatprep.subr.mxu0 0.0
    %435 = vmatpush1.msra.mxu0 0.0
    %436 = vmatprep.subr.mxu0 0.0
    %437 = vmatpush1.msra.mxu0 0.0
    %438 = vmatprep.subr.mxu0 0.0
    %439 = vmatpush1.msra.mxu0 0.0
    %440 = vmatprep.subr.mxu0 0.0
    %441 = vmatpush1.msra.mxu0 0.0
    %442 = vmatprep.subr.mxu0 0.0
    %443 = vmatpush1.msra.mxu0 0.0
    %444 = vmatprep.subr.mxu0 0.0
    %445 = vmatpush1.msra.mxu0 0.0
    %446 = vmatprep.subr.mxu0 0.0
    %447 = vmatpush1.msra.mxu0 0.0
    %448 = vmatprep.subr.mxu0 0.0
    %449 = vmatpush1.msra.mxu0 0.0
    %450 = vmatprep.mubr.f32.mxu0 0.0
    %451 = vmatmul.mubr.f32.gmra.mrb[0].mxu0 %v171
    %v452 = vpop.f32.mrb[0].mxu0
    %v453 = vadd.f32 %v116, %v452
    %v454 = vpop.f32.mrb[0].mxu0
    %v455 = vadd.f32 %v120, %v454
    %456 = vdwg.mxu0
    %457 = vmatprep.subr.mxu0 %v62
    %458 = vmatpush1.msra.mxu0 %v61
    %459 = vmatprep.subr.mxu0 %v78
    %460 = vmatpush1.msra.mxu0 %v77
    %461 = vmatprep.subr.mxu0 0.0
    %462 = vmatpush1.msra.mxu0 0.0
    %463 = vmatprep.subr.mxu0 0.0
    %464 = vmatpush1.msra.mxu0 0.0
    %465 = vmatprep.subr.mxu0 0.0
    %466 = vmatpush1.msra.mxu0 0.0
    %467 = vmatprep.subr.mxu0 0.0
    %468 = vmatpush1.msra.mxu0 0.0
    %469 = vmatprep.subr.mxu0 0.0
    %470 = vmatpush1.msra.mxu0 0.0
    %471 = vmatprep.subr.mxu0 0.0
    %472 = vmatpush1.msra.mxu0 0.0
    %473 = vmatprep.subr.mxu0 0.0
    %474 = vmatpush1.msra.mxu0 0.0
    %475 = vmatprep.subr.mxu0 0.0
    %476 = vmatpush1.msra.mxu0 0.0
    %477 = vmatprep.subr.mxu0 0.0
    %478 = vmatpush1.msra.mxu0 0.0
    %479 = vmatprep.subr.mxu0 0.0
    %480 = vmatpush1.msra.mxu0 0.0
    %481 = vmatprep.subr.mxu0 0.0
    %482 = vmatpush1.msra.mxu0 0.0
    %483 = vmatprep.subr.mxu0 0.0
    %484 = vmatpush1.msra.mxu0 0.0
    %485 = vmatprep.subr.mxu0 0.0
    %486 = vmatpush1.msra.mxu0 0.0
    %487 = vmatprep.subr.mxu0 0.0
    %488 = vmatpush1.msra.mxu0 0.0
    %489 = vmatprep.subr.mxu0 0.0
    %490 = vmatpush1.msra.mxu0 0.0
    %491 = vmatprep.subr.mxu0 0.0
    %492 = vmatpush1.msra.mxu0 0.0
    %493 = vmatprep.subr.mxu0 0.0
    %494 = vmatpush1.msra.mxu0 0.0
    %495 = vmatprep.subr.mxu0 0.0
    %496 = vmatpush1.msra.mxu0 0.0
    %497 = vmatprep.subr.mxu0 0.0
    %498 = vmatpush1.msra.mxu0 0.0
    %499 = vmatprep.subr.mxu0 0.0
    %500 = vmatpush1.msra.mxu0 0.0
    %501 = vmatprep.subr.mxu0 0.0
    %502 = vmatpush1.msra.mxu0 0.0
    %503 = vmatprep.subr.mxu0 0.0
    %504 = vmatpush1.msra.mxu0 0.0
    %505 = vmatprep.subr.mxu0 0.0
    %506 = vmatpush1.msra.mxu0 0.0
    %507 = vmatprep.subr.mxu0 0.0
    %508 = vmatpush1.msra.mxu0 0.0
    %509 = vmatprep.subr.mxu0 0.0
    %510 = vmatpush1.msra.mxu0 0.0
    %511 = vmatprep.subr.mxu0 0.0
    %512 = vmatpush1.msra.mxu0 0.0
    %513 = vmatprep.subr.mxu0 0.0
    %514 = vmatpush1.msra.mxu0 0.0
    %515 = vmatprep.subr.mxu0 0.0
    %516 = vmatpush1.msra.mxu0 0.0
    %517 = vmatprep.subr.mxu0 0.0
    %518 = vmatpush1.msra.mxu0 0.0
    %519 = vmatprep.subr.mxu0 0.0
    %520 = vmatpush1.msra.mxu0 0.0
    %521 = vmatprep.mubr.f32.mxu0 0.0
    %522 = vmatmul.mubr.f32.gmra.mrb[0].mxu0 %v171
    %v523 = vpop.f32.mrb[0].mxu0
    %v524 = vadd.f32 %v124, %v523
    %v525 = vpop.f32.mrb[0].mxu0
    %v526 = vadd.f32 %v128, %v525
    %527 = vdwg.mxu0
    %528 = vmatprep.subr.mxu0 %v64
    %529 = vmatpush1.msra.mxu0 %v63
    %530 = vmatprep.subr.mxu0 %v80
    %531 = vmatpush1.msra.mxu0 %v79
    %532 = vmatprep.subr.mxu0 0.0
    %533 = vmatpush1.msra.mxu0 0.0
    %534 = vmatprep.subr.mxu0 0.0
    %535 = vmatpush1.msra.mxu0 0.0
    %536 = vmatprep.subr.mxu0 0.0
    %537 = vmatpush1.msra.mxu0 0.0
    %538 = vmatprep.subr.mxu0 0.0
    %539 = vmatpush1.msra.mxu0 0.0
    %540 = vmatprep.subr.mxu0 0.0
    %541 = vmatpush1.msra.mxu0 0.0
    %542 = vmatprep.subr.mxu0 0.0
    %543 = vmatpush1.msra.mxu0 0.0
    %544 = vmatprep.subr.mxu0 0.0
    %545 = vmatpush1.msra.mxu0 0.0
    %546 = vmatprep.subr.mxu0 0.0
    %547 = vmatpush1.msra.mxu0 0.0
    %548 = vmatprep.subr.mxu0 0.0
    %549 = vmatpush1.msra.mxu0 0.0
    %550 = vmatprep.subr.mxu0 0.0
    %551 = vmatpush1.msra.mxu0 0.0
    %552 = vmatprep.subr.mxu0 0.0
    %553 = vmatpush1.msra.mxu0 0.0
    %554 = vmatprep.subr.mxu0 0.0
    %555 = vmatpush1.msra.mxu0 0.0
    %556 = vmatprep.subr.mxu0 0.0
    %557 = vmatpush1.msra.mxu0 0.0
    %558 = vmatprep.subr.mxu0 0.0
    %559 = vmatpush1.msra.mxu0 0.0
    %560 = vmatprep.subr.mxu0 0.0
    %561 = vmatpush1.msra.mxu0 0.0
    %562 = vmatprep.subr.mxu0 0.0
    %563 = vmatpush1.msra.mxu0 0.0
    %564 = vmatprep.subr.mxu0 0.0
    %565 = vmatpush1.msra.mxu0 0.0
    %566 = vmatprep.subr.mxu0 0.0
    %567 = vmatpush1.msra.mxu0 0.0
    %568 = vmatprep.subr.mxu0 0.0
    %569 = vmatpush1.msra.mxu0 0.0
    %570 = vmatprep.subr.mxu0 0.0
    %571 = vmatpush1.msra.mxu0 0.0
    %572 = vmatprep.subr.mxu0 0.0
    %573 = vmatpush1.msra.mxu0 0.0
    %574 = vmatprep.subr.mxu0 0.0
    %575 = vmatpush1.msra.mxu0 0.0
    %576 = vmatprep.subr.mxu0 0.0
    %577 = vmatpush1.msra.mxu0 0.0
    %578 = vmatprep.subr.mxu0 0.0
    %579 = vmatpush1.msra.mxu0 0.0
    %580 = vmatprep.subr.mxu0 0.0
    %581 = vmatpush1.msra.mxu0 0.0
    %582 = vmatprep.subr.mxu0 0.0
    %583 = vmatpush1.msra.mxu0 0.0
    %584 = vmatprep.subr.mxu0 0.0
    %585 = vmatpush1.msra.mxu0 0.0
    %586 = vmatprep.subr.mxu0 0.0
    %587 = vmatpush1.msra.mxu0 0.0
    %588 = vmatprep.subr.mxu0 0.0
    %589 = vmatpush1.msra.mxu0 0.0
    %590 = vmatprep.subr.mxu0 0.0
    %591 = vmatpush1.msra.mxu0 0.0
    %592 = vmatprep.mubr.f32.mxu0 0.0
    %593 = vmatmul.mubr.f32.gmra.mrb[0].mxu0 %v171
    %v594 = vpop.f32.mrb[0].mxu0
    %v595 = vadd.f32 %v132, %v594
    %v596 = vpop.f32.mrb[0].mxu0
    %v597 = vadd.f32 %v136, %v596
    %598 = vdwg.mxu0
    %599 = vmatprep.subr.mxu0 %v66
    %600 = vmatpush1.msra.mxu0 %v65
    %601 = vmatprep.subr.mxu0 %v82
    %602 = vmatpush1.msra.mxu0 %v81
    %603 = vmatprep.subr.mxu0 0.0
    %604 = vmatpush1.msra.mxu0 0.0
    %605 = vmatprep.subr.mxu0 0.0
    %606 = vmatpush1.msra.mxu0 0.0
    %607 = vmatprep.subr.mxu0 0.0
    %608 = vmatpush1.msra.mxu0 0.0
    %609 = vmatprep.subr.mxu0 0.0
    %610 = vmatpush1.msra.mxu0 0.0
    %611 = vmatprep.subr.mxu0 0.0
    %612 = vmatpush1.msra.mxu0 0.0
    %613 = vmatprep.subr.mxu0 0.0
    %614 = vmatpush1.msra.mxu0 0.0
    %615 = vmatprep.subr.mxu0 0.0
    %616 = vmatpush1.msra.mxu0 0.0
    %617 = vmatprep.subr.mxu0 0.0
    %618 = vmatpush1.msra.mxu0 0.0
    %619 = vmatprep.subr.mxu0 0.0
    %620 = vmatpush1.msra.mxu0 0.0
    %621 = vmatprep.subr.mxu0 0.0
    %622 = vmatpush1.msra.mxu0 0.0
    %623 = vmatprep.subr.mxu0 0.0
    %624 = vmatpush1.msra.mxu0 0.0
    %625 = vmatprep.subr.mxu0 0.0
    %626 = vmatpush1.msra.mxu0 0.0
    %627 = vmatprep.subr.mxu0 0.0
    %628 = vmatpush1.msra.mxu0 0.0
    %629 = vmatprep.subr.mxu0 0.0
    %630 = vmatpush1.msra.mxu0 0.0
    %631 = vmatprep.subr.mxu0 0.0
    %632 = vmatpush1.msra.mxu0 0.0
    %633 = vmatprep.subr.mxu0 0.0
    %634 = vmatpush1.msra.mxu0 0.0
    %635 = vmatprep.subr.mxu0 0.0
    %636 = vmatpush1.msra.mxu0 0.0
    %637 = vmatprep.subr.mxu0 0.0
    %638 = vmatpush1.msra.mxu0 0.0
    %639 = vmatprep.subr.mxu0 0.0
    %640 = vmatpush1.msra.mxu0 0.0
    %641 = vmatprep.subr.mxu0 0.0
    %642 = vmatpush1.msra.mxu0 0.0
    %643 = vmatprep.subr.mxu0 0.0
    %644 = vmatpush1.msra.mxu0 0.0
    %645 = vmatprep.subr.mxu0 0.0
    %646 = vmatpush1.msra.mxu0 0.0
    %647 = vmatprep.subr.mxu0 0.0
    %648 = vmatpush1.msra.mxu0 0.0
    %649 = vmatprep.subr.mxu0 0.0
    %650 = vmatpush1.msra.mxu0 0.0
    %651 = vmatprep.subr.mxu0 0.0
    %652 = vmatpush1.msra.mxu0 0.0
    %653 = vmatprep.subr.mxu0 0.0
    %654 = vmatpush1.msra.mxu0 0.0
    %655 = vmatprep.subr.mxu0 0.0
    %656 = vmatpush1.msra.mxu0 0.0
    %657 = vmatprep.subr.mxu0 0.0
    %658 = vmatpush1.msra.mxu0 0.0
    %659 = vmatprep.subr.mxu0 0.0
    %660 = vmatpush1.msra.mxu0 0.0
    %661 = vmatprep.subr.mxu0 0.0
    %662 = vmatpush1.msra.mxu0 0.0
    %663 = vmatprep.mubr.f32.mxu0 0.0
    %664 = vmatmul.mubr.f32.gmra.mrb[0].mxu0 %v171
    %v665 = vpop.f32.mrb[0].mxu0
    %v666 = vadd.f32 %v140, %v665
    %v667 = vpop.f32.mrb[0].mxu0
    %v668 = vadd.f32 %v144, %v667
    %669 = vdwg.mxu0
    %670 = vmatprep.subr.mxu0 %v68
    %671 = vmatpush1.msra.mxu0 %v67
    %672 = vmatprep.subr.mxu0 %v84
    %673 = vmatpush1.msra.mxu0 %v83
    %674 = vmatprep.subr.mxu0 0.0
    %675 = vmatpush1.msra.mxu0 0.0
    %676 = vmatprep.subr.mxu0 0.0
    %677 = vmatpush1.msra.mxu0 0.0
    %678 = vmatprep.subr.mxu0 0.0
    %679 = vmatpush1.msra.mxu0 0.0
    %680 = vmatprep.subr.mxu0 0.0
    %681 = vmatpush1.msra.mxu0 0.0
    %682 = vmatprep.subr.mxu0 0.0
    %683 = vmatpush1.msra.mxu0 0.0
    %684 = vmatprep.subr.mxu0 0.0
    %685 = vmatpush1.msra.mxu0 0.0
    %686 = vmatprep.subr.mxu0 0.0
    %687 = vmatpush1.msra.mxu0 0.0
    %688 = vmatprep.subr.mxu0 0.0
    %689 = vmatpush1.msra.mxu0 0.0
    %690 = vmatprep.subr.mxu0 0.0
    %691 = vmatpush1.msra.mxu0 0.0
    %692 = vmatprep.subr.mxu0 0.0
    %693 = vmatpush1.msra.mxu0 0.0
    %694 = vmatprep.subr.mxu0 0.0
    %695 = vmatpush1.msra.mxu0 0.0
    %696 = vmatprep.subr.mxu0 0.0
    %697 = vmatpush1.msra.mxu0 0.0
    %698 = vmatprep.subr.mxu0 0.0
    %699 = vmatpush1.msra.mxu0 0.0
    %700 = vmatprep.subr.mxu0 0.0
    %701 = vmatpush1.msra.mxu0 0.0
    %702 = vmatprep.subr.mxu0 0.0
    %703 = vmatpush1.msra.mxu0 0.0
    %704 = vmatprep.subr.mxu0 0.0
    %705 = vmatpush1.msra.mxu0 0.0
    %706 = vmatprep.subr.mxu0 0.0
    %707 = vmatpush1.msra.mxu0 0.0
    %708 = vmatprep.subr.mxu0 0.0
    %709 = vmatpush1.msra.mxu0 0.0
    %710 = vmatprep.subr.mxu0 0.0
    %711 = vmatpush1.msra.mxu0 0.0
    %712 = vmatprep.subr.mxu0 0.0
    %713 = vmatpush1.msra.mxu0 0.0
    %714 = vmatprep.subr.mxu0 0.0
    %715 = vmatpush1.msra.mxu0 0.0
    %716 = vmatprep.subr.mxu0 0.0
    %717 = vmatpush1.msra.mxu0 0.0
    %718 = vmatprep.subr.mxu0 0.0
    %719 = vmatpush1.msra.mxu0 0.0
    %720 = vmatprep.subr.mxu0 0.0
    %721 = vmatpush1.msra.mxu0 0.0
    %722 = vmatprep.subr.mxu0 0.0
    %723 = vmatpush1.msra.mxu0 0.0
    %724 = vmatprep.subr.mxu0 0.0
    %725 = vmatpush1.msra.mxu0 0.0
    %726 = vmatprep.subr.mxu0 0.0
    %727 = vmatpush1.msra.mxu0 0.0
    %728 = vmatprep.subr.mxu0 0.0
    %729 = vmatpush1.msra.mxu0 0.0
    %730 = vmatprep.subr.mxu0 0.0
    %731 = vmatpush1.msra.mxu0 0.0
    %732 = vmatprep.subr.mxu0 0.0
    %733 = vmatpush1.msra.mxu0 0.0
    %734 = vmatprep.mubr.f32.mxu0 0.0
    %735 = vmatmul.mubr.f32.gmra.mrb[0].mxu0 %v171
    %v736 = vpop.f32.mrb[0].mxu0
    %v737 = vadd.f32 %v148, %v736
    %v738 = vpop.f32.mrb[0].mxu0
    %v739 = vadd.f32 %v152, %v738
    %740 = vdwg.mxu0
    %v757 = vcombine.low %v240, %v242
    %v758 = vcombine.low %v311, %v313
    %v760 = vunpack.c.l.s4 1983009808
    %v761 = vunpack.c.0.s8 %v760
    %v762 = vlaneseq
    %v763 = vshrl.u32 %v762, 7
    %v764 = vsub.s32 %v761, %v763
    %v765 = vrot.slane %v757, %v764
    %v767 = vunpack.c.l.s4 1983009808
    %v768 = vunpack.c.0.s8 %v767
    %v769 = vlaneseq
    %v770 = vshrl.u32 %v769, 7
    %v771 = vsub.s32 %v768, %v770
    %v772 = vrot.slane %v758, %v771
    %v773 = vcombine.low %v765, %v772
    %v774 = vcombine.low %v382, %v384
    %v775 = vcombine.low %v453, %v455
    %v777 = vunpack.c.l.s4 1983009808
    %v778 = vunpack.c.0.s8 %v777
    %v779 = vlaneseq
    %v780 = vshrl.u32 %v779, 7
    %v781 = vsub.s32 %v778, %v780
    %v782 = vrot.slane %v774, %v781
    %v784 = vunpack.c.l.s4 1983009808
    %v785 = vunpack.c.0.s8 %v784
    %v786 = vlaneseq
    %v787 = vshrl.u32 %v786, 7
    %v788 = vsub.s32 %v785, %v787
    %v789 = vrot.slane %v775, %v788
    %v790 = vcombine.low %v782, %v789
    %v791 = vcombine.low %v524, %v526
    %v792 = vcombine.low %v595, %v597
    %v794 = vunpack.c.l.s4 1983009808
    %v795 = vunpack.c.0.s8 %v794
    %v796 = vlaneseq
    %v797 = vshrl.u32 %v796, 7
    %v798 = vsub.s32 %v795, %v797
    %v799 = vrot.slane %v791, %v798
    %v801 = vunpack.c.l.s4 1983009808
    %v802 = vunpack.c.0.s8 %v801
    %v803 = vlaneseq
    %v804 = vshrl.u32 %v803, 7
    %v805 = vsub.s32 %v802, %v804
    %v806 = vrot.slane %v792, %v805
    %v807 = vcombine.low %v799, %v806
    %v808 = vcombine.low %v666, %v668
    %v809 = vcombine.low %v737, %v739
    %v811 = vunpack.c.l.s4 1983009808
    %v812 = vunpack.c.0.s8 %v811
    %v813 = vlaneseq
    %v814 = vshrl.u32 %v813, 7
    %v815 = vsub.s32 %v812, %v814
    %v816 = vrot.slane %v808, %v815
    %v818 = vunpack.c.l.s4 1983009808
    %v819 = vunpack.c.0.s8 %v818
    %v820 = vlaneseq
    %v821 = vshrl.u32 %v820, 7
    %v822 = vsub.s32 %v819, %v821
    %v823 = vrot.slane %v809, %v822
    %v824 = vcombine.low %v816, %v823
    %829 = vst [vmem:[#allocation8] sm:$0xff] %v773
    %830 = vst [vmem:[#allocation8 + $0x8] sm:$0xff] %v790
    %831 = vst [vmem:[#allocation8 + $0x10] sm:$0xff] %v807
    %832 = vst [vmem:[#allocation8 + $0x18] sm:$0xff] %v824
    // Predicated region
    $region26: #{tpu_custom_call.1} parent=1 // pred_check
      _
    $region27: #{tpu_custom_call.1} parent=1 // pred_check_branch
      %834 = sbr.rel (0) target = $region29
    $region28: #{tpu_custom_call.1} parent=1 // pred_region
      %s836 = ssub.s32 512, 512
      %837 = vsyncadd [#allocation4], %s836
      %s839 = sshll.u32 [#allocation8], 4
      %s840 = int_to_ptr.vmem [resolvable:$true] %s839
      %842 = dma.vmem_to_hbm [thread:$0]  %s840, 512, %s3, [#allocation4]
    $region29: #{tpu_custom_call.1} parent=1 // pred_fallthru
      _
    // Predicated region
    $region30: #{tpu_custom_call.1} parent=1 // pred_check
      _
    $region31: #{tpu_custom_call.1} parent=1 // pred_check_branch
      %844 = sbr.rel (0) target = $region33
    $region32: #{tpu_custom_call.1} parent=1 // pred_region
      %845 = dma.done [#allocation4], 512
    $region33: #{tpu_custom_call.1} parent=1 // pred_fallthru
      _
    %846 = vsyncpa [#allocation3], 1
    %847 = vsyncpa [#allocation6], 1
    %848 = vsyncpa [#allocation4], 1

</llo_original>
